<compile_context>
chip_gen: v7x
topology: tpu7x:2x2x1
jax: 0.10.0
libtpu: 0.0.40
codegen_flags: <defaults>
</compile_context>

<pallas_src>
import jax
import jax.numpy as jnp
from jax.experimental import pallas as pl
from jax.experimental.pallas import tpu as pltpu


def highway_kernel(x_ref, w_ref, b_ref, o_ref):
    """x_ref/o_ref: (C, tm) token tile; w_ref: (n_layers, 2C, C); b_ref: (n_layers, 2C, 1)."""
    C = x_ref.shape[0]
    n_layers = w_ref.shape[0]

    h = x_ref[...].astype(jnp.float32)                     # (C, tm) carried state

    # Static unroll over layers (n_layers is small and known at trace time).
    for l in range(n_layers):
        w = w_ref[l]                                       # (2C, C)  [gate ; nonlin]
        b = b_ref[l]                                       # (2C, 1)
        y = jnp.dot(w, h, preferred_element_type=jnp.float32) + b   # (2C, tm)
        gate = jax.nn.sigmoid(y[:C])                       # (C, tm)
        nonlin = jnp.maximum(y[C:], 0.0)                   # ReLU, (C, tm)
        h = h + gate * (nonlin - h)                        # == gate*nonlin + (1-gate)*h

    o_ref[...] = h.astype(o_ref.dtype)


def highway_forward(x_ncl, w_gate, b_gate, w_nonlin, b_nonlin, *, tm=256):
    """x_ncl: (N, C, L) f32; w_*: (n_layers, C, C) (out, in); b_*: (n_layers, C)."""
    N, C, L = x_ncl.shape
    n_layers = w_gate.shape[0]
    M = N * L

    # (N, C, L) -> (C, M): tokens on the lane axis (lane-dense for realistic M).
    x_cm = jnp.transpose(x_ncl, (1, 0, 2)).reshape(C, M)

    # Fuse gate + nonlinear weights/biases along the output-channel axis.
    w_cat = jnp.concatenate([w_gate, w_nonlin], axis=1)              # (n, 2C, C)
    b_cat = jnp.concatenate([b_gate, b_nonlin], axis=1)[..., None]   # (n, 2C, 1)

    # Token tiling: single full-width block for small M, otherwise pad M up to
    # a multiple of the tile so the lane axis tiles at multiples of 128.
    if M <= tm:
        tm_eff = M
        m_pad = M
    else:
        tm_eff = tm
        m_pad = pl.cdiv(M, tm) * tm
    if m_pad != M:
        x_cm = jnp.pad(x_cm, ((0, 0), (0, m_pad - M)))

    out_cm = pl.pallas_call(
        highway_kernel,
        out_shape=jax.ShapeDtypeStruct((C, m_pad), x_ncl.dtype),
        grid_spec=pltpu.PrefetchScalarGridSpec(
            num_scalar_prefetch=0,
            grid=(m_pad // tm_eff,),
            in_specs=[
                pl.BlockSpec((C, tm_eff), lambda i: (0, i)),            # token tile
                pl.BlockSpec((n_layers, 2 * C, C), lambda i: (0, 0, 0)),  # all weights, resident
                pl.BlockSpec((n_layers, 2 * C, 1), lambda i: (0, 0, 0)),  # all biases, resident
            ],
            out_specs=pl.BlockSpec((C, tm_eff), lambda i: (0, i)),
        ),
        compiler_params=pltpu.CompilerParams(
            dimension_semantics=("parallel",)),   # token tiles independent -> megacore-shardable
    )(x_cm, w_cat, b_cat)

    out_cm = out_cm[:, :M]
    # (C, M) -> (N, C, L)
    return jnp.transpose(out_cm.reshape(C, N, L), (1, 0, 2))


def highway_reference(x_ncl, w_gate, b_gate, w_nonlin, b_nonlin):
    """Pure-JAX reference mirroring the PyTorch forward (inference)."""
    x = x_ncl
    n_layers = w_gate.shape[0]
    for i in range(n_layers):
        # Conv1d k=1: out[n,o,l] = sum_c W[o,c] x[n,c,l] + b[o]
        g = jax.nn.sigmoid(
            jnp.einsum("oc,ncl->nol", w_gate[i], x) + b_gate[i][None, :, None])
        nl = jax.nn.relu(
            jnp.einsum("oc,ncl->nol", w_nonlin[i], x) + b_nonlin[i][None, :, None])
        x = g * nl + (1.0 - g) * x
    return x


if __name__ == "__main__":
    # Small shapes consistent with Highway(layer_num=2, size=32) on (N, C, L) input.
    N, C, L = 2, 32, 8
    n_layers = 2

    key = jax.random.PRNGKey(0)
    k_x, k_wg, k_bg, k_wn, k_bn = jax.random.split(key, 5)

    x = jax.random.normal(k_x, (N, C, L), dtype=jnp.float32)

    # Deterministic parameter init (Conv1d weight shape (out, in, 1) -> squeezed to (out, in)).
    scale = 1.0 / jnp.sqrt(jnp.float32(C))
    w_gate = jax.random.normal(k_wg, (n_layers, C, C), dtype=jnp.float32) * scale
    b_gate = jax.random.normal(k_bg, (n_layers, C), dtype=jnp.float32) * 0.1
    w_nonlin = jax.random.normal(k_wn, (n_layers, C, C), dtype=jnp.float32) * scale
    b_nonlin = jax.random.normal(k_bn, (n_layers, C), dtype=jnp.float32) * 0.1

    out = highway_forward(x, w_gate, b_gate, w_nonlin, b_nonlin)
    out = jax.block_until_ready(out)

    ref = highway_reference(x, w_gate, b_gate, w_nonlin, b_nonlin)
    assert out.shape == (N, C, L)
    assert jnp.allclose(out, ref, atol=1e-5, rtol=1e-5), "mismatch vs reference"

    print("KERNEL_OK")
</pallas_src>

<mosaic_0001>
module attributes {stable_mosaic.version = 11 : i64} {
  func.func @highway_kernel(%arg0: i32, %arg1: memref<32x16xf32, #tpu.memory_space<vmem>>, %arg2: memref<2x64x32xf32, #tpu.memory_space<vmem>>, %arg3: memref<2x64x1xf32, #tpu.memory_space<vmem>>, %arg4: memref<32x16xf32, #tpu.memory_space<vmem>>) attributes {dimension_semantics = [#tpu.dimension_semantics<parallel>], iteration_bounds = array<i64: 1>, scalar_prefetch = 0 : i64, scratch_operands = 0 : i64, tpu.core_type = #tpu.core_type<tc>, window_params = [{transform_indices = @transform_0, window_bounds = array<i64: 32, 16>}, {pipeline_mode = #tpu.pipeline_mode<synchronous>, transform_indices = @transform_1, window_bounds = array<i64: 2, 64, 32>}, {pipeline_mode = #tpu.pipeline_mode<synchronous>, transform_indices = @transform_2, window_bounds = array<i64: 2, 64, 1>}, {transform_indices = @transform_3, window_bounds = array<i64: 32, 16>}]} {
    %c0 = arith.constant 0 : index
    %c0_0 = arith.constant 0 : index
    %0 = vector.load %arg1[%c0, %c0_0] : memref<32x16xf32, #tpu.memory_space<vmem>>, vector<32x16xf32>
    %c0_1 = arith.constant 0 : index
    %c0_2 = arith.constant 0 : index
    %c0_3 = arith.constant 0 : index
    %1 = vector.load %arg2[%c0_1, %c0_2, %c0_3] : memref<2x64x32xf32, #tpu.memory_space<vmem>>, vector<1x64x32xf32>
    %2 = vector.shape_cast %1 : vector<1x64x32xf32> to vector<64x32xf32>
    %c0_4 = arith.constant 0 : index
    %c0_5 = arith.constant 0 : index
    %c0_6 = arith.constant 0 : index
    %3 = vector.load %arg3[%c0_4, %c0_5, %c0_6] : memref<2x64x1xf32, #tpu.memory_space<vmem>>, vector<1x64x1xf32>
    %4 = vector.shape_cast %3 : vector<1x64x1xf32> to vector<64x1xf32>
    %cst = arith.constant dense<0.000000e+00> : vector<64x16xf32>
    %5 = tpu.matmul %2, %0, %cst {dimension_numbers = #tpu.dot_dimension_numbers<[1], [0], [0], [1], [0, 0, 1, 1], [], []>} : vector<64x32xf32>, vector<32x16xf32>, vector<64x16xf32> -> vector<64x16xf32>
    %6 = vector.broadcast %4 : vector<64x1xf32> to vector<64x16xf32>
    %7 = arith.addf %5, %6 : vector<64x16xf32>
    %8 = vector.extract_strided_slice %7 {offsets = [0, 0], sizes = [32, 16], strides = [1, 1]} : vector<64x16xf32> to vector<32x16xf32>
    %9 = arith.negf %8 : vector<32x16xf32>
    %10 = math.exp %9 : vector<32x16xf32>
    %cst_7 = arith.constant 1.000000e+00 : f32
    %11 = vector.broadcast %cst_7 : f32 to vector<32x16xf32>
    %12 = arith.addf %11, %10 : vector<32x16xf32>
    %13 = arith.divf %11, %12 : vector<32x16xf32>
    %14 = vector.extract_strided_slice %7 {offsets = [32, 0], sizes = [32, 16], strides = [1, 1]} : vector<64x16xf32> to vector<32x16xf32>
    %cst_8 = arith.constant 0.000000e+00 : f32
    %15 = vector.broadcast %cst_8 : f32 to vector<32x16xf32>
    %16 = arith.maximumf %14, %15 : vector<32x16xf32>
    %17 = arith.subf %16, %0 : vector<32x16xf32>
    %18 = arith.mulf %13, %17 : vector<32x16xf32>
    %19 = arith.addf %0, %18 : vector<32x16xf32>
    %c1 = arith.constant 1 : index
    %c0_9 = arith.constant 0 : index
    %c0_10 = arith.constant 0 : index
    %20 = vector.load %arg2[%c1, %c0_9, %c0_10] : memref<2x64x32xf32, #tpu.memory_space<vmem>>, vector<1x64x32xf32>
    %21 = vector.shape_cast %20 : vector<1x64x32xf32> to vector<64x32xf32>
    %c1_11 = arith.constant 1 : index
    %c0_12 = arith.constant 0 : index
    %c0_13 = arith.constant 0 : index
    %22 = vector.load %arg3[%c1_11, %c0_12, %c0_13] : memref<2x64x1xf32, #tpu.memory_space<vmem>>, vector<1x64x1xf32>
    %23 = vector.shape_cast %22 : vector<1x64x1xf32> to vector<64x1xf32>
    %cst_14 = arith.constant dense<0.000000e+00> : vector<64x16xf32>
    %24 = tpu.matmul %21, %19, %cst_14 {dimension_numbers = #tpu.dot_dimension_numbers<[1], [0], [0], [1], [0, 0, 1, 1], [], []>} : vector<64x32xf32>, vector<32x16xf32>, vector<64x16xf32> -> vector<64x16xf32>
    %25 = vector.broadcast %23 : vector<64x1xf32> to vector<64x16xf32>
    %26 = arith.addf %24, %25 : vector<64x16xf32>
    %27 = vector.extract_strided_slice %26 {offsets = [0, 0], sizes = [32, 16], strides = [1, 1]} : vector<64x16xf32> to vector<32x16xf32>
    %28 = arith.negf %27 : vector<32x16xf32>
    %29 = math.exp %28 : vector<32x16xf32>
    %cst_15 = arith.constant 1.000000e+00 : f32
    %30 = vector.broadcast %cst_15 : f32 to vector<32x16xf32>
    %31 = arith.addf %30, %29 : vector<32x16xf32>
    %32 = arith.divf %30, %31 : vector<32x16xf32>
    %33 = vector.extract_strided_slice %26 {offsets = [32, 0], sizes = [32, 16], strides = [1, 1]} : vector<64x16xf32> to vector<32x16xf32>
    %cst_16 = arith.constant 0.000000e+00 : f32
    %34 = vector.broadcast %cst_16 : f32 to vector<32x16xf32>
    %35 = arith.maximumf %33, %34 : vector<32x16xf32>
    %36 = arith.subf %35, %19 : vector<32x16xf32>
    %37 = arith.mulf %32, %36 : vector<32x16xf32>
    %38 = arith.addf %19, %37 : vector<32x16xf32>
    %c0_17 = arith.constant 0 : index
    %c0_18 = arith.constant 0 : index
    %39 = vector.load %arg4[%c0_17, %c0_18] : memref<32x16xf32, #tpu.memory_space<vmem>>, vector<32x16xf32>
    tpu.vector_store %arg4[%c0_17, %c0_18], %38 {strides = array<i32>} : memref<32x16xf32, #tpu.memory_space<vmem>>, vector<32x16xf32>,
    return
  }
  func.func @transform_0(%arg0: i32) -> (i32, i32) {
    %c0_i32 = arith.constant 0 : i32
    %c0_i32_0 = arith.constant 0 : i32
    return %c0_i32, %arg0 : i32, i32
  }
  func.func @transform_1(%arg0: i32) -> (i32, i32, i32) {
    %c0_i32 = arith.constant 0 : i32
    %c0_i32_0 = arith.constant 0 : i32
    %c0_i32_1 = arith.constant 0 : i32
    %c0_i32_2 = arith.constant 0 : i32
    return %c0_i32, %c0_i32_0, %c0_i32_1 : i32, i32, i32
  }
  func.func @transform_2(%arg0: i32) -> (i32, i32, i32) {
    %c0_i32 = arith.constant 0 : i32
    %c0_i32_0 = arith.constant 0 : i32
    %c0_i32_1 = arith.constant 0 : i32
    %c0_i32_2 = arith.constant 0 : i32
    return %c0_i32, %c0_i32_0, %c0_i32_1 : i32, i32, i32
  }
  func.func @transform_3(%arg0: i32) -> (i32, i32) {
    %c0_i32 = arith.constant 0 : i32
    %c0_i32_0 = arith.constant 0 : i32
    return %c0_i32, %arg0 : i32, i32
  }
}

</mosaic_0001>

<llo_original>
// kernel: tpu_custom_call.1
$region0: #{tpu_custom_call.1}
  #allocation0 [shape = 'u32[]', space=smem, size = 0x4, offset = 0x4, fixed_abs, tag = 'smem constant byte address 0x4 - core index']
  #allocation1 [shape = 'u32[144,128]{1,0:T(1,128)}', space=vmem, size = 0x12000, scoped, tag = 'internal scratch']
  %s0 = inlined_call_operand.vmem [shape: f32[32,16], index: 0, kind: input, shape index: {}]
  %s1 = inlined_call_operand.vmem [shape: f32[2,64,32], index: 1, kind: input, shape index: {}]
  %s2 = inlined_call_operand.vmem [shape: f32[2,64,1], index: 2, kind: input, shape index: {}]
  %s3 = inlined_call_operand.vmem [shape: f32[32,16], index: 3, kind: output, shape index: {}]
  %s4 = sld [smem:[#allocation0]]
  $region22: #{tpu_custom_call.1} parent=0
    _
  %s6 = ssub.s32 1, %s4
  %s7 = scalar_select 0, %s6, %s4
  // Predicated region
  $region2: #{tpu_custom_call.1} parent=0 // pred_check
    _
  $region3: #{tpu_custom_call.1} parent=0 // pred_check_branch
    %9 = sbr.rel (0) target = $region5
  $region4: #{tpu_custom_call.1} parent=0 // pred_region
    _
  $region5: #{tpu_custom_call.1} parent=0 // pred_fallthru
    _
  // Predicated region
  $region6: #{tpu_custom_call.1} parent=0 // pred_check
    _
  $region7: #{tpu_custom_call.1} parent=0 // pred_check_branch
    %11 = sbr.rel (0) target = $region9
  $region8: #{tpu_custom_call.1} parent=0 // pred_region
    _
  $region9: #{tpu_custom_call.1} parent=0 // pred_fallthru
    _
  // Predicated region
  $region10: #{tpu_custom_call.1} parent=0 // pred_check
    _
  $region11: #{tpu_custom_call.1} parent=0 // pred_check_branch
    %13 = sbr.rel (0) target = $region13
  $region12: #{tpu_custom_call.1} parent=0 // pred_region
    _
  $region13: #{tpu_custom_call.1} parent=0 // pred_fallthru
    _
  %v14 = vld [vmem:[%s0] sm:$0xff]
  %v15 = vld [vmem:[%s0 + $0x8] sm:$0xff]
  %v16 = vld [vmem:[%s0 + $0x10] sm:$0xff]
  %v17 = vld [vmem:[%s0 + $0x18] sm:$0xff]
  %v18 = vld [vmem:[%s1] sm:$0xff]
  %v19 = vld [vmem:[%s1 + $0x8] sm:$0xff]
  %v20 = vld [vmem:[%s1 + $0x10] sm:$0xff]
  %v21 = vld [vmem:[%s1 + $0x18] sm:$0xff]
  %v22 = vld [vmem:[%s1 + $0x20] sm:$0xff]
  %v23 = vld [vmem:[%s1 + $0x28] sm:$0xff]
  %v24 = vld [vmem:[%s1 + $0x30] sm:$0xff]
  %v25 = vld [vmem:[%s1 + $0x38] sm:$0xff]
  %v26 = vld [vmem:[%s2] sm:$0xff]
  %v27 = vld [vmem:[%s2 + $0x8] sm:$0xff]
  %v28 = vld [vmem:[%s2 + $0x10] sm:$0xff]
  %v29 = vld [vmem:[%s2 + $0x18] sm:$0xff]
  %v30 = vld [vmem:[%s2 + $0x20] sm:$0xff]
  %v31 = vld [vmem:[%s2 + $0x28] sm:$0xff]
  %v32 = vld [vmem:[%s2 + $0x30] sm:$0xff]
  %v33 = vld [vmem:[%s2 + $0x38] sm:$0xff]
  %35 = vset.pattern.permute.xlu0 0
  %36 = vperm.xlu0 %35, %v26
  %v37 = vpop.permute.xlu0 %36
  %40 = vset.pattern.permute.xlu0 0
  %41 = vperm.xlu0 %40, %v27
  %v42 = vpop.permute.xlu0 %41
  %45 = vset.pattern.permute.xlu0 0
  %46 = vperm.xlu0 %45, %v28
  %v47 = vpop.permute.xlu0 %46
  %50 = vset.pattern.permute.xlu0 0
  %51 = vperm.xlu0 %50, %v29
  %v52 = vpop.permute.xlu0 %51
  %55 = vset.pattern.permute.xlu0 0
  %56 = vperm.xlu0 %55, %v30
  %v57 = vpop.permute.xlu0 %56
  %60 = vset.pattern.permute.xlu0 0
  %61 = vperm.xlu0 %60, %v31
  %v62 = vpop.permute.xlu0 %61
  %65 = vset.pattern.permute.xlu0 0
  %66 = vperm.xlu0 %65, %v32
  %v67 = vpop.permute.xlu0 %66
  %70 = vset.pattern.permute.xlu0 0
  %71 = vperm.xlu0 %70, %v33
  %v72 = vpop.permute.xlu0 %71
  %vm74 = vcmask 261120
  %v76 = vsel %vm74, %v18, 0
  %v79 = vsel %vm74, %v19, 0
  %v82 = vsel %vm74, %v20, 0
  %v85 = vsel %vm74, %v21, 0
  %v88 = vsel %vm74, %v22, 0
  %v91 = vsel %vm74, %v23, 0
  %v94 = vsel %vm74, %v24, 0
  %v97 = vsel %vm74, %v25, 0
  %99 = vmatprep.subr.mxu0 0.0
  %100 = vmatpush1.msra.mxu0 %v14
  %101 = vmatprep.subr.mxu0 0.0
  %102 = vmatpush1.msra.mxu0 %v15
  %103 = vmatprep.subr.mxu0 0.0
  %104 = vmatpush1.msra.mxu0 %v16
  %105 = vmatprep.subr.mxu0 0.0
  %106 = vmatpush1.msra.mxu0 %v17
  %107 = vmatprep.subr.mxu0 0.0
  %108 = vmatpush1.msra.mxu0 0.0
  %109 = vmatprep.subr.mxu0 0.0
  %110 = vmatpush1.msra.mxu0 0.0
  %111 = vmatprep.subr.mxu0 0.0
  %112 = vmatpush1.msra.mxu0 0.0
  %113 = vmatprep.subr.mxu0 0.0
  %114 = vmatpush1.msra.mxu0 0.0
  %115 = vmatprep.subr.mxu0 0.0
  %116 = vmatpush1.msra.mxu0 0.0
  %117 = vmatprep.subr.mxu0 0.0
  %118 = vmatpush1.msra.mxu0 0.0
  %119 = vmatprep.subr.mxu0 0.0
  %120 = vmatpush1.msra.mxu0 0.0
  %121 = vmatprep.subr.mxu0 0.0
  %122 = vmatpush1.msra.mxu0 0.0
  %123 = vmatprep.subr.mxu0 0.0
  %124 = vmatpush1.msra.mxu0 0.0
  %125 = vmatprep.subr.mxu0 0.0
  %126 = vmatpush1.msra.mxu0 0.0
  %127 = vmatprep.subr.mxu0 0.0
  %128 = vmatpush1.msra.mxu0 0.0
  %129 = vmatprep.subr.mxu0 0.0
  %130 = vmatpush1.msra.mxu0 0.0
  %131 = vmatprep.subr.mxu0 0.0
  %132 = vmatpush1.msra.mxu0 0.0
  %133 = vmatprep.subr.mxu0 0.0
  %134 = vmatpush1.msra.mxu0 0.0
  %135 = vmatprep.subr.mxu0 0.0
  %136 = vmatpush1.msra.mxu0 0.0
  %137 = vmatprep.subr.mxu0 0.0
  %138 = vmatpush1.msra.mxu0 0.0
  %139 = vmatprep.subr.mxu0 0.0
  %140 = vmatpush1.msra.mxu0 0.0
  %141 = vmatprep.subr.mxu0 0.0
  %142 = vmatpush1.msra.mxu0 0.0
  %143 = vmatprep.subr.mxu0 0.0
  %144 = vmatpush1.msra.mxu0 0.0
  %145 = vmatprep.subr.mxu0 0.0
  %146 = vmatpush1.msra.mxu0 0.0
  %147 = vmatprep.subr.mxu0 0.0
  %148 = vmatpush1.msra.mxu0 0.0
  %149 = vmatprep.subr.mxu0 0.0
  %150 = vmatpush1.msra.mxu0 0.0
  %151 = vmatprep.subr.mxu0 0.0
  %152 = vmatpush1.msra.mxu0 0.0
  %153 = vmatprep.subr.mxu0 0.0
  %154 = vmatpush1.msra.mxu0 0.0
  %155 = vmatprep.subr.mxu0 0.0
  %156 = vmatpush1.msra.mxu0 0.0
  %157 = vmatprep.subr.mxu0 0.0
  %158 = vmatpush1.msra.mxu0 0.0
  %159 = vmatprep.subr.mxu0 0.0
  %160 = vmatpush1.msra.mxu0 0.0
  %161 = vmatprep.subr.mxu0 0.0
  %162 = vmatpush1.msra.mxu0 0.0
  %163 = vmatprep.mubr.f32.mxu0 0.0
  %164 = vmatmul.mubr.f32.gmra.mrb[0].mxu0 %v76
  %v165 = vpop.f32.mrb[0].mxu0
  %v166 = vadd.f32 %v37, %v165
  %v167 = vpop.f32.mrb[0].mxu0
  %168 = vmatprep.mubr.f32.mxu0 0.0
  %169 = vmatmul.mubr.f32.gmra.mrb[0].mxu0 %v79
  %v170 = vpop.f32.mrb[0].mxu0
  %v171 = vadd.f32 %v42, %v170
  %v172 = vpop.f32.mrb[0].mxu0
  %173 = vmatprep.mubr.f32.mxu0 0.0
  %174 = vmatmul.mubr.f32.gmra.mrb[0].mxu0 %v82
  %v175 = vpop.f32.mrb[0].mxu0
  %v176 = vadd.f32 %v47, %v175
  %v177 = vpop.f32.mrb[0].mxu0
  %178 = vmatprep.mubr.f32.mxu0 0.0
  %179 = vmatmul.mubr.f32.gmra.mrb[0].mxu0 %v85
  %v180 = vpop.f32.mrb[0].mxu0
  %v181 = vadd.f32 %v52, %v180
  %v182 = vpop.f32.mrb[0].mxu0
  %183 = vmatprep.mubr.f32.mxu0 0.0
  %184 = vmatmul.mubr.f32.gmra.mrb[0].mxu0 %v88
  %v185 = vpop.f32.mrb[0].mxu0
  %v186 = vadd.f32 %v57, %v185
  %v187 = vpop.f32.mrb[0].mxu0
  %188 = vmatprep.mubr.f32.mxu0 0.0
  %189 = vmatmul.mubr.f32.gmra.mrb[0].mxu0 %v91
  %v190 = vpop.f32.mrb[0].mxu0
  %v191 = vadd.f32 %v62, %v190
  %v192 = vpop.f32.mrb[0].mxu0
  %193 = vmatprep.mubr.f32.mxu0 0.0
  %194 = vmatmul.mubr.f32.gmra.mrb[0].mxu0 %v94
  %v195 = vpop.f32.mrb[0].mxu0
  %v196 = vadd.f32 %v67, %v195
  %v197 = vpop.f32.mrb[0].mxu0
  %198 = vmatprep.mubr.f32.mxu0 0.0
  %199 = vmatmul.mubr.f32.gmra.mrb[0].mxu0 %v97
  %v200 = vpop.f32.mrb[0].mxu0
  %v201 = vadd.f32 %v72, %v200
  %v202 = vpop.f32.mrb[0].mxu0
  %203 = vdwg.mxu0
  %v204 = vxor.u32 %v166, 2147483648
  %v205 = vxor.u32 %v171, 2147483648
  %v206 = vxor.u32 %v176, 2147483648
  %v207 = vxor.u32 %v181, 2147483648
  %v208 = vmul.f32 %v204, 1.442695
  %v209 = vpow.pop %v208
  %v210 = vmul.f32 %v205, 1.442695
  %v211 = vpow.pop %v210
  %v212 = vmul.f32 %v206, 1.442695
  %v213 = vpow.pop %v212
  %v214 = vmul.f32 %v207, 1.442695
  %v215 = vpow.pop %v214
  %v216 = vadd.f32 %v209, 1.0
  %v217 = vadd.f32 %v211, 1.0
  %v218 = vadd.f32 %v213, 1.0
  %v219 = vadd.f32 %v215, 1.0
  %v220 = vrcp.pop %v216
  %v221 = vmul.f32 1.0, %v220
  %v222 = vrcp.pop %v217
  %v223 = vmul.f32 1.0, %v222
  %v224 = vrcp.pop %v218
  %v225 = vmul.f32 1.0, %v224
  %v226 = vrcp.pop %v219
  %v227 = vmul.f32 1.0, %v226
  %v228 = vmax.f32 %v186, 0.0
  %v229 = vmax.f32 %v191, 0.0
  %v230 = vmax.f32 %v196, 0.0
  %v231 = vmax.f32 %v201, 0.0
  %v232 = vsub.f32 %v228, %v14
  %v233 = vsub.f32 %v229, %v15
  %v234 = vsub.f32 %v230, %v16
  %v235 = vsub.f32 %v231, %v17
  %v236 = vmul.f32 %v221, %v232
  %v237 = vmul.f32 %v223, %v233
  %v238 = vmul.f32 %v225, %v234
  %v239 = vmul.f32 %v227, %v235
  %v240 = vadd.f32 %v14, %v236
  %v241 = vadd.f32 %v15, %v237
  %v242 = vadd.f32 %v16, %v238
  %v243 = vadd.f32 %v17, %v239
  %s244 = scalar_lea.vmem %s1, 64
  %v245 = vld [vmem:[%s244] sm:$0xff]
  %v246 = vld [vmem:[%s244 + $0x8] sm:$0xff]
  %v247 = vld [vmem:[%s244 + $0x10] sm:$0xff]
  %v248 = vld [vmem:[%s244 + $0x18] sm:$0xff]
  %v249 = vld [vmem:[%s244 + $0x20] sm:$0xff]
  %v250 = vld [vmem:[%s244 + $0x28] sm:$0xff]
  %v251 = vld [vmem:[%s244 + $0x30] sm:$0xff]
  %v252 = vld [vmem:[%s244 + $0x38] sm:$0xff]
  %s253 = scalar_lea.vmem %s2, 64
  %v254 = vld [vmem:[%s253] sm:$0xff]
  %v255 = vld [vmem:[%s253 + $0x8] sm:$0xff]
  %v256 = vld [vmem:[%s253 + $0x10] sm:$0xff]
  %v257 = vld [vmem:[%s253 + $0x18] sm:$0xff]
  %v258 = vld [vmem:[%s253 + $0x20] sm:$0xff]
  %v259 = vld [vmem:[%s253 + $0x28] sm:$0xff]
  %v260 = vld [vmem:[%s253 + $0x30] sm:$0xff]
  %v261 = vld [vmem:[%s253 + $0x38] sm:$0xff]
  %263 = vset.pattern.permute.xlu0 0
  %264 = vperm.xlu0 %263, %v254
  %v265 = vpop.permute.xlu0 %264
  %268 = vset.pattern.permute.xlu0 0
  %269 = vperm.xlu0 %268, %v255
  %v270 = vpop.permute.xlu0 %269
  %273 = vset.pattern.permute.xlu0 0
  %274 = vperm.xlu0 %273, %v256
  %v275 = vpop.permute.xlu0 %274
  %278 = vset.pattern.permute.xlu0 0
  %279 = vperm.xlu0 %278, %v257
  %v280 = vpop.permute.xlu0 %279
  %283 = vset.pattern.permute.xlu0 0
  %284 = vperm.xlu0 %283, %v258
  %v285 = vpop.permute.xlu0 %284
  %288 = vset.pattern.permute.xlu0 0
  %289 = vperm.xlu0 %288, %v259
  %v290 = vpop.permute.xlu0 %289
  %293 = vset.pattern.permute.xlu0 0
  %294 = vperm.xlu0 %293, %v260
  %v295 = vpop.permute.xlu0 %294
  %298 = vset.pattern.permute.xlu0 0
  %299 = vperm.xlu0 %298, %v261
  %v300 = vpop.permute.xlu0 %299
  %v303 = vsel %vm74, %v245, 0
  %v306 = vsel %vm74, %v246, 0
  %v309 = vsel %vm74, %v247, 0
  %v312 = vsel %vm74, %v248, 0
  %v315 = vsel %vm74, %v249, 0
  %v318 = vsel %vm74, %v250, 0
  %v321 = vsel %vm74, %v251, 0
  %v324 = vsel %vm74, %v252, 0
  %326 = vmatprep.subr.mxu0 0.0
  %327 = vmatpush1.msra.mxu0 %v240
  %328 = vmatprep.subr.mxu0 0.0
  %329 = vmatpush1.msra.mxu0 %v241
  %330 = vmatprep.subr.mxu0 0.0
  %331 = vmatpush1.msra.mxu0 %v242
  %332 = vmatprep.subr.mxu0 0.0
  %333 = vmatpush1.msra.mxu0 %v243
  %334 = vmatprep.subr.mxu0 0.0
  %335 = vmatpush1.msra.mxu0 0.0
  %336 = vmatprep.subr.mxu0 0.0
  %337 = vmatpush1.msra.mxu0 0.0
  %338 = vmatprep.subr.mxu0 0.0
  %339 = vmatpush1.msra.mxu0 0.0
  %340 = vmatprep.subr.mxu0 0.0
  %341 = vmatpush1.msra.mxu0 0.0
  %342 = vmatprep.subr.mxu0 0.0
  %343 = vmatpush1.msra.mxu0 0.0
  %344 = vmatprep.subr.mxu0 0.0
  %345 = vmatpush1.msra.mxu0 0.0
  %346 = vmatprep.subr.mxu0 0.0
  %347 = vmatpush1.msra.mxu0 0.0
  %348 = vmatprep.subr.mxu0 0.0
  %349 = vmatpush1.msra.mxu0 0.0
  %350 = vmatprep.subr.mxu0 0.0
  %351 = vmatpush1.msra.mxu0 0.0
  %352 = vmatprep.subr.mxu0 0.0
  %353 = vmatpush1.msra.mxu0 0.0
  %354 = vmatprep.subr.mxu0 0.0
  %355 = vmatpush1.msra.mxu0 0.0
  %356 = vmatprep.subr.mxu0 0.0
  %357 = vmatpush1.msra.mxu0 0.0
  %358 = vmatprep.subr.mxu0 0.0
  %359 = vmatpush1.msra.mxu0 0.0
  %360 = vmatprep.subr.mxu0 0.0
  %361 = vmatpush1.msra.mxu0 0.0
  %362 = vmatprep.subr.mxu0 0.0
  %363 = vmatpush1.msra.mxu0 0.0
  %364 = vmatprep.subr.mxu0 0.0
  %365 = vmatpush1.msra.mxu0 0.0
  %366 = vmatprep.subr.mxu0 0.0
  %367 = vmatpush1.msra.mxu0 0.0
  %368 = vmatprep.subr.mxu0 0.0
  %369 = vmatpush1.msra.mxu0 0.0
  %370 = vmatprep.subr.mxu0 0.0
  %371 = vmatpush1.msra.mxu0 0.0
  %372 = vmatprep.subr.mxu0 0.0
  %373 = vmatpush1.msra.mxu0 0.0
  %374 = vmatprep.subr.mxu0 0.0
  %375 = vmatpush1.msra.mxu0 0.0
  %376 = vmatprep.subr.mxu0 0.0
  %377 = vmatpush1.msra.mxu0 0.0
  %378 = vmatprep.subr.mxu0 0.0
  %379 = vmatpush1.msra.mxu0 0.0
  %380 = vmatprep.subr.mxu0 0.0
  %381 = vmatpush1.msra.mxu0 0.0
  %382 = vmatprep.subr.mxu0 0.0
  %383 = vmatpush1.msra.mxu0 0.0
  %384 = vmatprep.subr.mxu0 0.0
  %385 = vmatpush1.msra.mxu0 0.0
  %386 = vmatprep.subr.mxu0 0.0
  %387 = vmatpush1.msra.mxu0 0.0
  %388 = vmatprep.subr.mxu0 0.0
  %389 = vmatpush1.msra.mxu0 0.0
  %390 = vmatprep.mubr.f32.mxu0 0.0
  %391 = vmatmul.mubr.f32.gmra.mrb[0].mxu0 %v303
  %v392 = vpop.f32.mrb[0].mxu0
  %v393 = vadd.f32 %v265, %v392
  %v394 = vpop.f32.mrb[0].mxu0
  %395 = vmatprep.mubr.f32.mxu0 0.0
  %396 = vmatmul.mubr.f32.gmra.mrb[0].mxu0 %v306
  %v397 = vpop.f32.mrb[0].mxu0
  %v398 = vadd.f32 %v270, %v397
  %v399 = vpop.f32.mrb[0].mxu0
  %400 = vmatprep.mubr.f32.mxu0 0.0
  %401 = vmatmul.mubr.f32.gmra.mrb[0].mxu0 %v309
  %v402 = vpop.f32.mrb[0].mxu0
  %v403 = vadd.f32 %v275, %v402
  %v404 = vpop.f32.mrb[0].mxu0
  %405 = vmatprep.mubr.f32.mxu0 0.0
  %406 = vmatmul.mubr.f32.gmra.mrb[0].mxu0 %v312
  %v407 = vpop.f32.mrb[0].mxu0
  %v408 = vadd.f32 %v280, %v407
  %v409 = vpop.f32.mrb[0].mxu0
  %410 = vmatprep.mubr.f32.mxu0 0.0
  %411 = vmatmul.mubr.f32.gmra.mrb[0].mxu0 %v315
  %v412 = vpop.f32.mrb[0].mxu0
  %v413 = vadd.f32 %v285, %v412
  %v414 = vpop.f32.mrb[0].mxu0
  %415 = vmatprep.mubr.f32.mxu0 0.0
  %416 = vmatmul.mubr.f32.gmra.mrb[0].mxu0 %v318
  %v417 = vpop.f32.mrb[0].mxu0
  %v418 = vadd.f32 %v290, %v417
  %v419 = vpop.f32.mrb[0].mxu0
  %420 = vmatprep.mubr.f32.mxu0 0.0
  %421 = vmatmul.mubr.f32.gmra.mrb[0].mxu0 %v321
  %v422 = vpop.f32.mrb[0].mxu0
  %v423 = vadd.f32 %v295, %v422
  %v424 = vpop.f32.mrb[0].mxu0
  %425 = vmatprep.mubr.f32.mxu0 0.0
  %426 = vmatmul.mubr.f32.gmra.mrb[0].mxu0 %v324
  %v427 = vpop.f32.mrb[0].mxu0
  %v428 = vadd.f32 %v300, %v427
  %v429 = vpop.f32.mrb[0].mxu0
  %430 = vdwg.mxu0
  %v431 = vxor.u32 %v393, 2147483648
  %v432 = vxor.u32 %v398, 2147483648
  %v433 = vxor.u32 %v403, 2147483648
  %v434 = vxor.u32 %v408, 2147483648
  %v435 = vmul.f32 %v431, 1.442695
  %v436 = vpow.pop %v435
  %v437 = vmul.f32 %v432, 1.442695
  %v438 = vpow.pop %v437
  %v439 = vmul.f32 %v433, 1.442695
  %v440 = vpow.pop %v439
  %v441 = vmul.f32 %v434, 1.442695
  %v442 = vpow.pop %v441
  %v443 = vadd.f32 %v436, 1.0
  %v444 = vadd.f32 %v438, 1.0
  %v445 = vadd.f32 %v440, 1.0
  %v446 = vadd.f32 %v442, 1.0
  %v447 = vrcp.pop %v443
  %v448 = vmul.f32 1.0, %v447
  %v449 = vrcp.pop %v444
  %v450 = vmul.f32 1.0, %v449
  %v451 = vrcp.pop %v445
  %v452 = vmul.f32 1.0, %v451
  %v453 = vrcp.pop %v446
  %v454 = vmul.f32 1.0, %v453
  %v455 = vmax.f32 %v413, 0.0
  %v456 = vmax.f32 %v418, 0.0
  %v457 = vmax.f32 %v423, 0.0
  %v458 = vmax.f32 %v428, 0.0
  %v459 = vsub.f32 %v455, %v240
  %v460 = vsub.f32 %v456, %v241
  %v461 = vsub.f32 %v457, %v242
  %v462 = vsub.f32 %v458, %v243
  %v463 = vmul.f32 %v448, %v459
  %v464 = vmul.f32 %v450, %v460
  %v465 = vmul.f32 %v452, %v461
  %v466 = vmul.f32 %v454, %v462
  %v467 = vadd.f32 %v240, %v463
  %v468 = vadd.f32 %v241, %v464
  %v469 = vadd.f32 %v242, %v465
  %v470 = vadd.f32 %v243, %v466
  %vm471 = vcmask 130048
  %472 = vst.msk [vmem:[%s3] sm:$0xff] %vm471, %v467
  %473 = vst.msk [vmem:[%s3 + $0x8] sm:$0xff] %vm471, %v468
  %474 = vst.msk [vmem:[%s3 + $0x10] sm:$0xff] %vm471, %v469
  %475 = vst.msk [vmem:[%s3 + $0x18] sm:$0xff] %vm471, %v470
  // Predicated region
  $region14: #{tpu_custom_call.1} parent=0 // pred_check
    _
  $region15: #{tpu_custom_call.1} parent=0 // pred_check_branch
    %477 = sbr.rel (0) target = $region17
  $region16: #{tpu_custom_call.1} parent=0 // pred_region
    _
  $region17: #{tpu_custom_call.1} parent=0 // pred_fallthru
    _
  // Predicated region
  $region18: #{tpu_custom_call.1} parent=0 // pred_check
    _
  $region19: #{tpu_custom_call.1} parent=0 // pred_check_branch
    %479 = sbr.rel (0) target = $region21
  $region20: #{tpu_custom_call.1} parent=0 // pred_region
    _
  $region21: #{tpu_custom_call.1} parent=0 // pred_fallthru
    _

</llo_original>
